<compile_context>
chip_gen: v5e
topology: v5e:2x2
jax: 0.10.0
libtpu: 0.0.40
codegen_flags: <defaults>
</compile_context>

<pallas_src>
import functools

import jax
import jax.numpy as jnp
from jax import lax
from jax.experimental import pallas as pl
from jax.experimental.pallas import tpu as pltpu

EPS = 1e-5  # torch.nn.BatchNorm1d default


def _round_up(x, m):
    return ((x + m - 1) // m) * m


# ---------------------------------------------------------------------------
# Fast path: whole (padded) array resident in VMEM, single fused pass.
# ---------------------------------------------------------------------------
def _fused_kernel(x_ref, gamma_ref, beta_ref, out_ref, *, n_rows):
    x = x_ref[...].astype(jnp.float32)                       # (Np, Cp)
    inv_n = 1.0 / float(n_rows)

    s = jnp.sum(x, axis=0, keepdims=True)                    # (1, Cp)
    sq = jnp.sum(x * x, axis=0, keepdims=True)               # (1, Cp)
    mean = s * inv_n
    # E[x^2] - mean^2 accumulated in f32; clamp to guard tiny negative values.
    var = jnp.maximum(sq * inv_n - mean * mean, 0.0)

    scale = gamma_ref[...].astype(jnp.float32) * lax.rsqrt(var + EPS)
    shift = beta_ref[...].astype(jnp.float32) - mean * scale

    out_ref[...] = (x * scale + shift).astype(out_ref.dtype)


# ---------------------------------------------------------------------------
# Tiled two-pass path.
# ---------------------------------------------------------------------------
def _stats_kernel(x_ref, gamma_ref, beta_ref, scale_ref, shift_ref,
                  sum_ref, sq_ref, *, n_rows):
    i = pl.program_id(0)

    @pl.when(i == 0)
    def _init():
        sum_ref[...] = jnp.zeros_like(sum_ref)
        sq_ref[...] = jnp.zeros_like(sq_ref)

    x = x_ref[...].astype(jnp.float32)                       # (TR, Cp)
    sum_ref[...] += jnp.sum(x, axis=0, keepdims=True)
    sq_ref[...] += jnp.sum(x * x, axis=0, keepdims=True)

    @pl.when(i == pl.num_programs(0) - 1)
    def _finalize():
        inv_n = 1.0 / float(n_rows)
        mean = sum_ref[...] * inv_n
        var = jnp.maximum(sq_ref[...] * inv_n - mean * mean, 0.0)
        scale = gamma_ref[...].astype(jnp.float32) * lax.rsqrt(var + EPS)
        shift = beta_ref[...].astype(jnp.float32) - mean * scale
        scale_ref[...] = scale
        shift_ref[...] = shift


def _normalize_kernel(x_ref, scale_ref, shift_ref, out_ref):
    x = x_ref[...]                                           # (TR, Cp)
    if jnp.dtype(x_ref.dtype) == jnp.bfloat16:
        # v6e/v7x: keep the hot pass in bf16 (halves vreg/VMEM footprint).
        scale = scale_ref[...].astype(jnp.bfloat16)
        shift = shift_ref[...].astype(jnp.bfloat16)
        out_ref[...] = x * scale + shift
    else:
        y = x.astype(jnp.float32) * scale_ref[...] + shift_ref[...]
        out_ref[...] = y.astype(out_ref.dtype)


def _choose_row_tile(c_pad):
    # Target ~2 MiB per (f32-equivalent) input tile; rows multiple of 8.
    target_bytes = 2 * 1024 * 1024
    tr = target_bytes // (c_pad * 4)
    tr = max(8, min(1024, (tr // 8) * 8))
    return tr


# ---------------------------------------------------------------------------
# Wrapper
# ---------------------------------------------------------------------------
def my_bn(x, gamma, beta, *, force_tiled=False):
    """x: (B, L, C); gamma, beta: (C,). Returns (B, L, C)."""
    B, L, C = x.shape
    N = B * L

    # Lane-dense channel dim: pad C to a multiple of 128.
    Cp = _round_up(max(C, 128), 128)

    x2d = x.reshape(N, C)
    g2d = gamma.reshape(1, C).astype(jnp.float32)
    b2d = beta.reshape(1, C).astype(jnp.float32)

    # Fast path when the f32 working set is comfortably inside VMEM
    # (conservative so it also fits v7x's 64 MiB physical VMEM).
    fast = (not force_tiled) and (_round_up(N, 8) * Cp * 4 <= 6 * 1024 * 1024)

    if fast:
        TR = _round_up(N, 8)
        Np = TR
    else:
        TR = _choose_row_tile(Cp)
        Np = _round_up(N, TR)

    # Zero padding: padded rows/channels add 0 to the sums (stats divide by the
    # real N); padded gamma/beta are 0 so padded output lanes are finite.
    xp = jnp.pad(x2d, ((0, Np - N), (0, Cp - C)))
    gp = jnp.pad(g2d, ((0, 0), (0, Cp - C)))
    bp = jnp.pad(b2d, ((0, 0), (0, Cp - C)))

    if fast:
        out_p = pl.pallas_call(
            functools.partial(_fused_kernel, n_rows=N),
            out_shape=jax.ShapeDtypeStruct((Np, Cp), x.dtype),
            in_specs=[
                pl.BlockSpec((Np, Cp), lambda: (0, 0)),
                pl.BlockSpec((1, Cp), lambda: (0, 0)),
                pl.BlockSpec((1, Cp), lambda: (0, 0)),
            ],
            out_specs=pl.BlockSpec((Np, Cp), lambda: (0, 0)),
            compiler_params=pltpu.CompilerParams(vmem_limit_bytes=48 << 20),
        )(xp, gp, bp)
    else:
        n_tiles = Np // TR

        # Pass 1: per-channel stats -> fused scale / shift.
        scale, shift = pl.pallas_call(
            functools.partial(_stats_kernel, n_rows=N),
            out_shape=(
                jax.ShapeDtypeStruct((1, Cp), jnp.float32),
                jax.ShapeDtypeStruct((1, Cp), jnp.float32),
            ),
            grid=(n_tiles,),
            in_specs=[
                pl.BlockSpec((TR, Cp), lambda i: (i, 0)),
                pl.BlockSpec((1, Cp), lambda i: (0, 0)),
                pl.BlockSpec((1, Cp), lambda i: (0, 0)),
            ],
            out_specs=(
                pl.BlockSpec((1, Cp), lambda i: (0, 0)),
                pl.BlockSpec((1, Cp), lambda i: (0, 0)),
            ),
            scratch_shapes=[
                pltpu.VMEM((1, Cp), jnp.float32),
                pltpu.VMEM((1, Cp), jnp.float32),
            ],
            compiler_params=pltpu.CompilerParams(
                dimension_semantics=("arbitrary",),
                vmem_limit_bytes=48 << 20,
            ),
        )(xp, gp, bp)

        # Pass 2: y = x * scale + shift (streaming, parallel over row tiles).
        out_p = pl.pallas_call(
            _normalize_kernel,
            out_shape=jax.ShapeDtypeStruct((Np, Cp), x.dtype),
            grid=(n_tiles,),
            in_specs=[
                pl.BlockSpec((TR, Cp), lambda i: (i, 0)),
                pl.BlockSpec((1, Cp), lambda i: (0, 0)),
                pl.BlockSpec((1, Cp), lambda i: (0, 0)),
            ],
            out_specs=pl.BlockSpec((TR, Cp), lambda i: (i, 0)),
            compiler_params=pltpu.CompilerParams(
                dimension_semantics=("parallel",),
                vmem_limit_bytes=48 << 20,
            ),
        )(xp, scale, shift)

    return out_p[:N, :C].reshape(B, L, C)


def _reference(x, gamma, beta):
    # Pure-JAX reference matching torch BatchNorm1d training-mode forward.
    xf = x.astype(jnp.float32)
    mean = jnp.mean(xf, axis=(0, 1), keepdims=True)
    var = jnp.mean((xf - mean) ** 2, axis=(0, 1), keepdims=True)
    y = (xf - mean) / jnp.sqrt(var + EPS) * gamma + beta
    return y.astype(x.dtype)


if __name__ == "__main__":
    key = jax.random.PRNGKey(0)
    kx, kg, kb = jax.random.split(key, 3)

    B, L, C = 2, 8, 32  # (batch, seq, channels)
    x = jax.random.normal(kx, (B, L, C), dtype=jnp.float32)

    # Deterministic affine parameters (PyTorch default would be gamma=1,
    # beta=0; perturb so the affine path is exercised).
    gamma = 1.0 + 0.1 * jax.random.normal(kg, (C,), dtype=jnp.float32)
    beta = 0.1 * jax.random.normal(kb, (C,), dtype=jnp.float32)

    ref = _reference(x, gamma, beta)

    # Fast (VMEM-resident fused) path.
    out_fast = jax.block_until_ready(my_bn(x, gamma, beta))
    assert out_fast.shape == (B, L, C)
    assert jnp.allclose(out_fast, ref, atol=2e-5, rtol=1e-5), "fast path mismatch"

    # Tiled two-pass path (same numerics, exercised here for coverage).
    out_tiled = jax.block_until_ready(my_bn(x, gamma, beta, force_tiled=True))
    assert out_tiled.shape == (B, L, C)
    assert jnp.allclose(out_tiled, ref, atol=2e-5, rtol=1e-5), "tiled path mismatch"

    print("KERNEL_OK")
</pallas_src>

<mosaic_0001>
module attributes {stable_mosaic.version = 11 : i64} {
  func.func @_fused_kernel(%arg0: memref<16x128xf32, #tpu.memory_space<vmem>>, %arg1: memref<1x128xf32, #tpu.memory_space<vmem>>, %arg2: memref<1x128xf32, #tpu.memory_space<vmem>>, %arg3: memref<16x128xf32, #tpu.memory_space<vmem>>) attributes {dimension_semantics = [], scalar_prefetch = 0 : i64, scratch_operands = 0 : i64, tpu.core_type = #tpu.core_type<tc>} {
    %c0 = arith.constant 0 : index
    %c0_0 = arith.constant 0 : index
    %0 = vector.load %arg0[%c0, %c0_0] : memref<16x128xf32, #tpu.memory_space<vmem>>, vector<16x128xf32>
    %cst = arith.constant dense<0.000000e+00> : vector<128xf32>
    %1 = vector.multi_reduction <add>, %0, %cst [0] : vector<16x128xf32> to vector<128xf32>
    %2 = vector.shape_cast %1 : vector<128xf32> to vector<1x128xf32>
    %3 = arith.mulf %0, %0 : vector<16x128xf32>
    %cst_1 = arith.constant dense<0.000000e+00> : vector<128xf32>
    %4 = vector.multi_reduction <add>, %3, %cst_1 [0] : vector<16x128xf32> to vector<128xf32>
    %5 = vector.shape_cast %4 : vector<128xf32> to vector<1x128xf32>
    %cst_2 = arith.constant 6.250000e-02 : f32
    %6 = vector.broadcast %cst_2 : f32 to vector<1x128xf32>
    %7 = arith.mulf %2, %6 : vector<1x128xf32>
    %cst_3 = arith.constant 6.250000e-02 : f32
    %8 = vector.broadcast %cst_3 : f32 to vector<1x128xf32>
    %9 = arith.mulf %5, %8 : vector<1x128xf32>
    %10 = arith.mulf %7, %7 : vector<1x128xf32>
    %11 = arith.subf %9, %10 : vector<1x128xf32>
    %cst_4 = arith.constant 0.000000e+00 : f32
    %12 = vector.broadcast %cst_4 : f32 to vector<1x128xf32>
    %13 = arith.maximumf %11, %12 : vector<1x128xf32>
    %c0_5 = arith.constant 0 : index
    %c0_6 = arith.constant 0 : index
    %14 = vector.load %arg1[%c0_5, %c0_6] : memref<1x128xf32, #tpu.memory_space<vmem>>, vector<1x128xf32>
    %cst_7 = arith.constant 9.99999974E-6 : f32
    %15 = vector.broadcast %cst_7 : f32 to vector<1x128xf32>
    %16 = arith.addf %13, %15 : vector<1x128xf32>
    %17 = math.rsqrt %16 : vector<1x128xf32>
    %18 = arith.mulf %14, %17 : vector<1x128xf32>
    %c0_8 = arith.constant 0 : index
    %c0_9 = arith.constant 0 : index
    %19 = vector.load %arg2[%c0_8, %c0_9] : memref<1x128xf32, #tpu.memory_space<vmem>>, vector<1x128xf32>
    %20 = arith.mulf %7, %18 : vector<1x128xf32>
    %21 = arith.subf %19, %20 : vector<1x128xf32>
    %22 = vector.broadcast %18 : vector<1x128xf32> to vector<16x128xf32>
    %23 = arith.mulf %0, %22 : vector<16x128xf32>
    %24 = vector.broadcast %21 : vector<1x128xf32> to vector<16x128xf32>
    %25 = arith.addf %23, %24 : vector<16x128xf32>
    %c0_10 = arith.constant 0 : index
    %c0_11 = arith.constant 0 : index
    %26 = vector.load %arg3[%c0_10, %c0_11] : memref<16x128xf32, #tpu.memory_space<vmem>>, vector<16x128xf32>
    tpu.vector_store %arg3[%c0_10, %c0_11], %25 {strides = array<i32>} : memref<16x128xf32, #tpu.memory_space<vmem>>, vector<16x128xf32>,
    return
  }
}

</mosaic_0001>

<llo_original>
// kernel: tpu_custom_call.1
$region0: #{tpu_custom_call.1}
  #allocation0 [shape = 'u32[]', space=smem, size = 0x4, offset = 0x4, fixed_abs, tag = 'smem constant byte address 0x4 - core index']
  #allocation1 [shape = 'u32[72,128]{1,0:T(1,128)}', space=vmem, size = 0x9000, scoped, tag = 'internal scratch']
  %s0 = inlined_call_operand.hbm [shape: f32[16,128], index: 0, kind: input, shape index: {}]
  %s1 = inlined_call_operand.hbm [shape: f32[1,128], index: 1, kind: input, shape index: {}]
  %s2 = inlined_call_operand.vmem [shape: f32[1,128], index: 2, kind: input, shape index: {}]
  %s3 = inlined_call_operand.hbm [shape: f32[16,128], index: 3, kind: output, shape index: {}]
  %s4 = sld [smem:[#allocation0]]
  $region30: #{tpu_custom_call.1} parent=0
    _
  %s6 = ssub.s32 1, %s4
  %s7 = scalar_select 0, %s6, %s4
  $region1: #{tpu_custom_call.1} parent=0
    #allocation2 [shape = 'u8[8192]{0}', space=vmem, size = 0x2000, scoped, tag = 'input window, operand 0, single buffered']
    #allocation3 [shape = 's32[1]{0}', space=sflag, size = 0x4, scoped, tag = 'scoped memory for tpu_custom_call.1']
    #allocation4 [shape = 's32[1]{0}', space=sflag, size = 0x4, scoped, tag = 'scoped memory for tpu_custom_call.1']
    #allocation5 [shape = 'u8[512]{0}', space=vmem, size = 0x400, scoped, tag = 'input window, operand 1, single buffered']
    #allocation6 [shape = 's32[1]{0}', space=sflag, size = 0x4, scoped, tag = 'scoped memory for tpu_custom_call.1']
    #allocation7 [shape = 'u8[8192]{0}', space=vmem, size = 0x2000, scoped, tag = 'output window, operand 0, single buffered']
    %8 = vsyncpa [#allocation3], 0
    %9 = vsyncpa [#allocation6], 0
    %10 = vsyncpa [#allocation4], 0
    // Predicated region
    $region2: #{tpu_custom_call.1} parent=1 // pred_check
      _
    $region3: #{tpu_custom_call.1} parent=1 // pred_check_branch
      %12 = sbr.rel (0) target = $region5
    $region4: #{tpu_custom_call.1} parent=1 // pred_region
      %14 = vsyncadd [#allocation3], 0
      %s15 = sshll.u32 %s0, 4
      %s16 = int_to_ptr.hbm [resolvable:$true] %s15
      %s17 = sshll.u32 [#allocation2], 4
      %s18 = int_to_ptr.vmem [resolvable:$true] %s17
      %23 = dma.hbm_to_vmem [thread:$0]  %s16, 256, %s18, [#allocation3], 128, 128, 8
    $region5: #{tpu_custom_call.1} parent=1 // pred_fallthru
      _
    // Predicated region
    $region6: #{tpu_custom_call.1} parent=1 // pred_check
      _
    $region7: #{tpu_custom_call.1} parent=1 // pred_check_branch
      %25 = sbr.rel (0) target = $region9
    $region8: #{tpu_custom_call.1} parent=1 // pred_region
      %27 = vsyncadd [#allocation6], 0
      %s29 = sshll.u32 %s1, 4
      %s30 = int_to_ptr.hbm [resolvable:$true] %s29
      %s31 = sshll.u32 [#allocation5], 4
      %s32 = int_to_ptr.vmem [resolvable:$true] %s31
      %34 = dma.hbm_to_vmem [thread:$0]  %s30, 16, %s32, [#allocation6]
    $region9: #{tpu_custom_call.1} parent=1 // pred_fallthru
      _
    // Predicated region
    $region10: #{tpu_custom_call.1} parent=1 // pred_check
      _
    $region11: #{tpu_custom_call.1} parent=1 // pred_check_branch
      %36 = sbr.rel (0) target = $region13
    $region12: #{tpu_custom_call.1} parent=1 // pred_region
      _
    $region13: #{tpu_custom_call.1} parent=1 // pred_fallthru
      _
    // Predicated region
    $region14: #{tpu_custom_call.1} parent=1 // pred_check
      _
    $region15: #{tpu_custom_call.1} parent=1 // pred_check_branch
      %38 = sbr.rel (0) target = $region17
    $region16: #{tpu_custom_call.1} parent=1 // pred_region
      %40 = dma.done [#allocation3], 256
    $region17: #{tpu_custom_call.1} parent=1 // pred_fallthru
      _
    // Predicated region
    $region18: #{tpu_custom_call.1} parent=1 // pred_check
      _
    $region19: #{tpu_custom_call.1} parent=1 // pred_check_branch
      %42 = sbr.rel (0) target = $region21
    $region20: #{tpu_custom_call.1} parent=1 // pred_region
      %44 = dma.done [#allocation6], 16
    $region21: #{tpu_custom_call.1} parent=1 // pred_fallthru
      _
    %v45 = vld [vmem:[#allocation2] sm:$0xff]
    %v46 = vld [vmem:[#allocation2 + $0x8] sm:$0xff]
    %v47 = vadd.f32 %v45, %v46
    %v48 = vrot.slane %v47, 4
    %v49 = vadd.f32 %v47, %v48
    %v50 = vrot.slane %v49, 2
    %v51 = vadd.f32 %v49, %v50
    %v52 = vrot.slane %v51, 1
    %v53 = vadd.f32 %v51, %v52
    %v54 = vmul.f32 %v45, %v45
    %v55 = vmul.f32 %v46, %v46
    %v56 = vadd.f32 %v54, %v55
    %v57 = vrot.slane %v56, 4
    %v58 = vadd.f32 %v56, %v57
    %v59 = vrot.slane %v58, 2
    %v60 = vadd.f32 %v58, %v59
    %v61 = vrot.slane %v60, 1
    %v62 = vadd.f32 %v60, %v61
    %v63 = vmul.f32 %v53, 0.0625
    %v64 = vmul.f32 %v62, 0.0625
    %v65 = vmul.f32 %v63, %v63
    %v66 = vsub.f32 %v64, %v65
    %v67 = vmax.f32 %v66, 0.0
    %v68 = vld [vmem:[#allocation5] sm:$0x1]
    %v69 = vadd.f32 %v67, 1e-05
    %v70 = vrsqrt.pop %v69
    %v71 = vmul.f32 %v70, %v69
    %v72 = vmul.f32 %v71, %v70
    %v73 = vmul.f32 0.5, %v72
    %v74 = vsub.f32 1.5, %v73
    %v75 = vmul.f32 %v70, %v74
    %vm76 = vweird.f32 %v69
    %vm77 = vweird.f32 %v70
    %vm78 = vmor %vm76, %vm77
    %v79 = vsel %vm78, %v70, %v75
    %v80 = vmul.f32 %v68, %v79
    %v81 = vld [vmem:[%s2] sm:$0x1]
    %v82 = vmul.f32 %v63, %v80
    %v83 = vsub.f32 %v81, %v82
    %v85 = vperm.slane %v80, 0
    %v87 = vmul.f32 %v45, %v85
    %v88 = vmul.f32 %v46, %v85
    %v90 = vperm.slane %v83, 0
    %v92 = vadd.f32 %v87, %v90
    %v93 = vadd.f32 %v88, %v90
    %94 = vst [vmem:[#allocation7] sm:$0xff] %v92
    %95 = vst [vmem:[#allocation7 + $0x8] sm:$0xff] %v93
    // Predicated region
    $region22: #{tpu_custom_call.1} parent=1 // pred_check
      _
    $region23: #{tpu_custom_call.1} parent=1 // pred_check_branch
      %97 = sbr.rel (0) target = $region25
    $region24: #{tpu_custom_call.1} parent=1 // pred_region
      %99 = vsyncadd [#allocation4], 0
      %s100 = sshll.u32 [#allocation7], 4
      %s101 = int_to_ptr.vmem [resolvable:$true] %s100
      %s102 = sshll.u32 %s3, 4
      %s103 = int_to_ptr.hbm [resolvable:$true] %s102
      %108 = dma.vmem_to_hbm [thread:$0]  %s101, 256, %s103, [#allocation4], 128, 128, 8
    $region25: #{tpu_custom_call.1} parent=1 // pred_fallthru
      _
    // Predicated region
    $region26: #{tpu_custom_call.1} parent=1 // pred_check
      _
    $region27: #{tpu_custom_call.1} parent=1 // pred_check_branch
      %110 = sbr.rel (0) target = $region29
    $region28: #{tpu_custom_call.1} parent=1 // pred_region
      %112 = dma.done [#allocation4], 256
    $region29: #{tpu_custom_call.1} parent=1 // pred_fallthru
      _
    %113 = vsyncpa [#allocation3], 1
    %114 = vsyncpa [#allocation6], 1
    %115 = vsyncpa [#allocation4], 1

</llo_original>
